<compile_context>
chip_gen: v5e
topology: v5e:2x2
jax: 0.10.0
libtpu: 0.0.40
codegen_flags: <defaults>
</compile_context>

<pallas_src>
import jax
import jax.numpy as jnp
from jax import lax
from jax.experimental import pallas as pl
from jax.experimental.pallas import tpu as pltpu


def _round_up(x, m):
    return ((x + m - 1) // m) * m


def _exact_floordiv(a, d):
    """floor(a/d) for non-negative integer-valued f32 `a`, positive int `d`.

    Exact for a < 2**24: one correction step fixes any +-1 rounding of the
    reciprocal-multiply.  Pure VPU ops (no integer vector div needed).
    """
    df = jnp.float32(d)
    q = jnp.floor(a * (jnp.float32(1.0) / df))
    r = a - q * df
    q = q + (r >= df).astype(jnp.float32) - (r < 0.0).astype(jnp.float32)
    return q


# ---------------------------------------------------------------------------
# Pallas kernel: detection head over a tile of rows (rows = batch*cells)
#   x    : (TR, feat)        bf16 patch features
#   w1,b1: (feat, HP),(1,HP) bf16 / f32
#   w2   : (HP, NO)          bf16
#   dec  : (8, NO) f32 rows: [b2, P2, P1, P0c, MXs, MYs, 0, 0]
# decode per element (Horner):   out = (P2*s + P1)*s + P0,  s = sigmoid(z+b2)
#   P0 = MXs*cx + MYs*cy + P0c   (cx, cy derived in-kernel from the row index)
# which reproduces the YOLOv5 decode:
#   xy = (2*s - 0.5 + grid) * stride ,  wh = (2*s)^2 * anchor , conf/cls = s
# ---------------------------------------------------------------------------
def _make_detect_head_kernel(tile_rows, cells, nx):
    def kernel(x_ref, w1_ref, b1_ref, w2_ref, dec_ref, o_ref):
        # hidden layer (bf16 MXU, f32 accumulate) + ReLU
        h = jnp.dot(x_ref[...], w1_ref[...],
                    preferred_element_type=jnp.float32)
        h = jnp.maximum(h + b1_ref[...], 0.0)
        # output layer (bf16 MXU, f32 accumulate)
        z = jnp.dot(h.astype(jnp.bfloat16), w2_ref[...],
                    preferred_element_type=jnp.float32)        # (TR, NO) f32

        b2 = dec_ref[0:1, :]
        p2 = dec_ref[1:2, :]
        p1 = dec_ref[2:3, :]
        p0c = dec_ref[3:4, :]
        mxs = dec_ref[4:5, :]
        mys = dec_ref[5:6, :]

        s = jax.nn.sigmoid(z + b2)                             # EUP, f32

        # per-row grid offsets computed in-kernel (no P0 table from HBM)
        row = pl.program_id(0) * tile_rows + lax.broadcasted_iota(
            jnp.int32, (tile_rows, 1), 0)
        rowf = row.astype(jnp.float32)
        qb = _exact_floordiv(rowf, cells)                      # batch index
        cellf = rowf - qb * jnp.float32(cells)                 # cell in image
        cyf = _exact_floordiv(cellf, nx)
        cxf = cellf - cyf * jnp.float32(nx)
        p0 = mxs * cxf + mys * cyf + p0c                       # (TR, NO)

        o_ref[...] = ((p2 * s + p1) * s + p0).astype(o_ref.dtype)

    return kernel


class DetectMultiBackendPallas:
    """Synthetic stand-in for the TensorRT-backed DetectMultiBackend."""

    HPAD = 128    # padded hidden width (MXU/lane friendly)
    NO_PAD = 32   # padded output width (nao=27 -> 32; 4x less writeback vs 128)

    def __init__(self, imgsz=(32, 32), ch=3, nc=4, na=3, hidden=32, stride=8,
                 batch_size=2, seed=0):
        self.imgsz = imgsz
        self.ch = ch
        self.nc = nc
        self.na = na
        self.no = nc + 5
        self.hidden = hidden
        self.stride = stride
        self.batch_size = batch_size
        self.ny = imgsz[0] // stride
        self.nx = imgsz[1] // stride
        self.cells = self.ny * self.nx
        self.feat = ch * stride * stride
        self.nao = self.na * self.no
        assert self.nao <= self.NO_PAD and hidden <= self.HPAD
        # mirrors the 'images' binding shape check of the TRT wrapper
        self.images_shape = (batch_size, ch, imgsz[0], imgsz[1])

        # row (= batch*cells) tiling: aim for >=2 grid steps (v7x megacore),
        # cap tile at 1024 rows, round to 16 (bf16 sublane packing).
        self.rows = batch_size * self.cells
        half_rows = (self.rows + 1) // 2
        self.tile_rows = min(1024, _round_up(max(half_rows, 8), 16))
        self.rows_pad = _round_up(self.rows, self.tile_rows)
        self.grid_r = self.rows_pad // self.tile_rows

        # ---------------- deterministic parameter init (zero-padded) --------
        key = jax.random.PRNGKey(seed)
        k1, k2, k3, k4 = jax.random.split(key, 4)
        w1 = jax.random.normal(k1, (self.feat, hidden), jnp.float32) / jnp.sqrt(
            jnp.float32(self.feat))
        b1 = 0.01 * jax.random.normal(k2, (1, hidden), jnp.float32)
        w2 = jax.random.normal(k3, (hidden, self.nao), jnp.float32) / jnp.sqrt(
            jnp.float32(hidden))
        b2 = 0.01 * jax.random.normal(k4, (1, self.nao), jnp.float32)

        self.w1 = jnp.zeros((self.feat, self.HPAD), jnp.float32
                            ).at[:, :hidden].set(w1).astype(jnp.bfloat16)
        self.b1 = jnp.zeros((1, self.HPAD), jnp.float32).at[:, :hidden].set(b1)
        self.w2 = jnp.zeros((self.HPAD, self.NO_PAD), jnp.float32
                            ).at[:hidden, :self.nao].set(w2).astype(jnp.bfloat16)

        # ---------------- fused decode constant block (8, NO_PAD) -----------
        # column layout (anchor-major within a row): j = a*no + comp
        anchors = jnp.array([[10., 13.], [16., 30.], [33., 23.]], jnp.float32)
        assert na <= anchors.shape[0], "extend the anchor table for na > 3"
        j = jnp.arange(self.NO_PAD)
        valid = j < self.nao
        comp = jnp.where(valid, j % self.no, -1)
        a_idx = jnp.where(valid, j // self.no, 0)
        is_x = (comp == 0)
        is_y = (comp == 1)
        is_w = (comp == 2)
        is_h = (comp == 3)
        is_other = valid & (comp >= 4)                 # conf + cls
        st = float(stride)
        anc_w = anchors[a_idx, 0]
        anc_h = anchors[a_idx, 1]
        P2 = (jnp.where(is_w, 4.0 * anc_w, 0.0)
              + jnp.where(is_h, 4.0 * anc_h, 0.0))
        P1 = (jnp.where(is_x | is_y, 2.0 * st, 0.0)
              + jnp.where(is_other, 1.0, 0.0))
        P0c = jnp.where(is_x | is_y, -0.5 * st, 0.0)
        MXs = jnp.where(is_x, st, 0.0)
        MYs = jnp.where(is_y, st, 0.0)
        b2_row = jnp.zeros((self.NO_PAD,), jnp.float32).at[:self.nao].set(b2[0])

        dec = jnp.zeros((8, self.NO_PAD), jnp.float32)
        dec = dec.at[0].set(b2_row)
        dec = dec.at[1].set(P2.astype(jnp.float32))
        dec = dec.at[2].set(P1.astype(jnp.float32))
        dec = dec.at[3].set(P0c.astype(jnp.float32))
        dec = dec.at[4].set(MXs.astype(jnp.float32))
        dec = dec.at[5].set(MYs.astype(jnp.float32))
        self.dec = dec

        self._call = self._build_call()

    def _build_call(self):
        TR, RP = self.tile_rows, self.rows_pad
        feat, HP, NO = self.feat, self.HPAD, self.NO_PAD
        const2d = lambda r: (0, 0)

        kernel = _make_detect_head_kernel(TR, self.cells, self.nx)

        flops = int(2 * RP * (feat * HP + HP * NO))
        transcendentals = int(RP * NO)
        bytes_accessed = int(RP * feat * 2        # x (bf16)
                             + feat * HP * 2      # w1
                             + HP * 4             # b1
                             + HP * NO * 2        # w2
                             + 8 * NO * 4         # dec constants
                             + RP * NO * 4)       # output (f32)

        return pl.pallas_call(
            kernel,
            out_shape=jax.ShapeDtypeStruct((RP, NO), jnp.float32),
            grid_spec=pltpu.PrefetchScalarGridSpec(
                num_scalar_prefetch=0,
                grid=(self.grid_r,),
                in_specs=[
                    pl.BlockSpec((TR, feat), lambda r: (r, 0)),   # x
                    pl.BlockSpec((feat, HP), const2d),            # w1
                    pl.BlockSpec((1, HP), const2d),               # b1
                    pl.BlockSpec((HP, NO), const2d),              # w2
                    pl.BlockSpec((8, NO), const2d),               # dec consts
                ],
                out_specs=pl.BlockSpec((TR, NO), lambda r: (r, 0)),
            ),
            compiler_params=pltpu.CompilerParams(
                dimension_semantics=("parallel",)),
            cost_estimate=pl.CostEstimate(
                flops=flops,
                transcendentals=transcendentals,
                bytes_accessed=bytes_accessed),
        )

    def forward(self, im, val=False):
        # same shape assertion as the TRT wrapper's binding check
        assert im.shape == self.images_shape, (im.shape, self.images_shape)
        B, Cch, H, W = im.shape
        s = self.stride
        # NCHW -> per-cell patch features (B*cells, C*s*s)  (wrapper glue)
        x = im.reshape(B, Cch, self.ny, s, self.nx, s)
        x = jnp.transpose(x, (0, 2, 4, 1, 3, 5))            # (B, ny, nx, C, s, s)
        x = x.reshape(self.rows, self.feat).astype(jnp.bfloat16)
        if self.rows_pad != self.rows:
            x = jnp.pad(x, ((0, self.rows_pad - self.rows), (0, 0)))

        y = self._call(x, self.w1, self.b1, self.w2, self.dec)  # (rows_pad, 32)

        # strip padding, reorder to YOLOv5 (B, na*ny*nx, no) anchor-major
        y = y[:self.rows, :self.nao].reshape(B, self.cells, self.na, self.no)
        y = jnp.transpose(y, (0, 2, 1, 3)).reshape(B, self.na * self.cells,
                                                   self.no)
        return (y, []) if val else y

    def warmup(self, imgsz=None, half=False):
        shape = imgsz if imgsz is not None else self.images_shape
        im = jnp.zeros(shape, jnp.float32)
        return self.forward(im)

    __call__ = forward


if __name__ == "__main__":
    # small shapes consistent with the module's (B, 3, H, W) image input
    B, CH, H, W = 2, 3, 32, 32
    model = DetectMultiBackendPallas(imgsz=(H, W), ch=CH, nc=4, na=3,
                                     hidden=32, stride=8, batch_size=B)
    key = jax.random.PRNGKey(0)
    im = jax.random.normal(key, (B, CH, H, W), jnp.float32)

    y = model(im)
    y = jax.block_until_ready(y)
    assert y.shape == (B, model.na * model.cells, model.no), y.shape
    assert bool(jnp.all(jnp.isfinite(y)))
    print("KERNEL_OK")
</pallas_src>

<mosaic_0001>
module attributes {stable_mosaic.version = 11 : i64} {
  func.func @kernel(%arg0: i32, %arg1: memref<16x192xbf16, #tpu.memory_space<vmem>>, %arg2: memref<192x128xbf16, #tpu.memory_space<vmem>>, %arg3: memref<1x128xf32, #tpu.memory_space<vmem>>, %arg4: memref<128x32xbf16, #tpu.memory_space<vmem>>, %arg5: memref<8x32xf32, #tpu.memory_space<vmem>>, %arg6: memref<16x32xf32, #tpu.memory_space<vmem>>) attributes {dimension_semantics = [#tpu.dimension_semantics<parallel>], iteration_bounds = array<i64: 2>, scalar_prefetch = 0 : i64, scratch_operands = 0 : i64, tpu.core_type = #tpu.core_type<tc>, window_params = [{transform_indices = @transform_0, window_bounds = array<i64: 16, 192>}, {pipeline_mode = #tpu.pipeline_mode<synchronous>, transform_indices = @transform_1, window_bounds = array<i64: 192, 128>}, {pipeline_mode = #tpu.pipeline_mode<synchronous>, transform_indices = @transform_2, window_bounds = array<i64: 1, 128>}, {pipeline_mode = #tpu.pipeline_mode<synchronous>, transform_indices = @transform_3, window_bounds = array<i64: 128, 32>}, {pipeline_mode = #tpu.pipeline_mode<synchronous>, transform_indices = @transform_4, window_bounds = array<i64: 8, 32>}, {transform_indices = @transform_5, window_bounds = array<i64: 16, 32>}]} {
    %c0 = arith.constant 0 : index
    %c0_0 = arith.constant 0 : index
    %0 = vector.load %arg1[%c0, %c0_0] : memref<16x192xbf16, #tpu.memory_space<vmem>>, vector<16x192xbf16>
    %c0_1 = arith.constant 0 : index
    %c0_2 = arith.constant 0 : index
    %1 = vector.load %arg2[%c0_1, %c0_2] : memref<192x128xbf16, #tpu.memory_space<vmem>>, vector<192x128xbf16>
    %cst = arith.constant dense<0.000000e+00> : vector<16x128xf32>
    %2 = tpu.matmul %0, %1, %cst {dimension_numbers = #tpu.dot_dimension_numbers<[1], [0], [0], [1], [0, 0, 1, 1], [], []>} : vector<16x192xbf16>, vector<192x128xbf16>, vector<16x128xf32> -> vector<16x128xf32>
    %c0_3 = arith.constant 0 : index
    %c0_4 = arith.constant 0 : index
    %3 = vector.load %arg3[%c0_3, %c0_4] : memref<1x128xf32, #tpu.memory_space<vmem>>, vector<1x128xf32>
    %4 = vector.broadcast %3 : vector<1x128xf32> to vector<16x128xf32>
    %5 = arith.addf %2, %4 : vector<16x128xf32>
    %cst_5 = arith.constant 0.000000e+00 : f32
    %6 = vector.broadcast %cst_5 : f32 to vector<16x128xf32>
    %7 = arith.maximumf %5, %6 : vector<16x128xf32>
    %8 = arith.truncf %7 : vector<16x128xf32> to vector<16x128xbf16>
    %c0_6 = arith.constant 0 : index
    %c0_7 = arith.constant 0 : index
    %9 = vector.load %arg4[%c0_6, %c0_7] : memref<128x32xbf16, #tpu.memory_space<vmem>>, vector<128x32xbf16>
    %cst_8 = arith.constant dense<0.000000e+00> : vector<16x32xf32>
    %10 = tpu.matmul %8, %9, %cst_8 {dimension_numbers = #tpu.dot_dimension_numbers<[1], [0], [0], [1], [0, 0, 1, 1], [], []>} : vector<16x128xbf16>, vector<128x32xbf16>, vector<16x32xf32> -> vector<16x32xf32>
    %c0_9 = arith.constant 0 : index
    %c0_10 = arith.constant 0 : index
    %11 = vector.load %arg5[%c0_9, %c0_10] : memref<8x32xf32, #tpu.memory_space<vmem>>, vector<1x32xf32>
    %c1 = arith.constant 1 : index
    %c0_11 = arith.constant 0 : index
    %12 = vector.load %arg5[%c1, %c0_11] : memref<8x32xf32, #tpu.memory_space<vmem>>, vector<1x32xf32>
    %c2 = arith.constant 2 : index
    %c0_12 = arith.constant 0 : index
    %13 = vector.load %arg5[%c2, %c0_12] : memref<8x32xf32, #tpu.memory_space<vmem>>, vector<1x32xf32>
    %c3 = arith.constant 3 : index
    %c0_13 = arith.constant 0 : index
    %14 = vector.load %arg5[%c3, %c0_13] : memref<8x32xf32, #tpu.memory_space<vmem>>, vector<1x32xf32>
    %c4 = arith.constant 4 : index
    %c0_14 = arith.constant 0 : index
    %15 = vector.load %arg5[%c4, %c0_14] : memref<8x32xf32, #tpu.memory_space<vmem>>, vector<1x32xf32>
    %c5 = arith.constant 5 : index
    %c0_15 = arith.constant 0 : index
    %16 = vector.load %arg5[%c5, %c0_15] : memref<8x32xf32, #tpu.memory_space<vmem>>, vector<1x32xf32>
    %17 = vector.broadcast %11 : vector<1x32xf32> to vector<16x32xf32>
    %18 = arith.addf %10, %17 : vector<16x32xf32>
    %19 = arith.negf %18 : vector<16x32xf32>
    %20 = math.exp %19 : vector<16x32xf32>
    %cst_16 = arith.constant 1.000000e+00 : f32
    %21 = vector.broadcast %cst_16 : f32 to vector<16x32xf32>
    %22 = arith.addf %21, %20 : vector<16x32xf32>
    %23 = arith.divf %21, %22 : vector<16x32xf32>
    %c16_i32 = arith.constant 16 : i32
    %24 = arith.muli %arg0, %c16_i32 : i32
    %25 = tpu.iota {dimensions = array<i32: 0>} : vector<16x1xi32>
    %26 = vector.broadcast %24 : i32 to vector<16x1xi32>
    %27 = arith.addi %26, %25 : vector<16x1xi32>
    %28 = arith.sitofp %27 : vector<16x1xi32> to vector<16x1xf32>
    %cst_17 = arith.constant 1.000000e+00 : f32
    %cst_18 = arith.constant 1.600000e+01 : f32
    %29 = arith.divf %cst_17, %cst_18 : f32
    %30 = vector.broadcast %29 : f32 to vector<16x1xf32>
    %31 = arith.mulf %28, %30 : vector<16x1xf32>
    %32 = math.floor %31 : vector<16x1xf32>
    %cst_19 = arith.constant 1.600000e+01 : f32
    %33 = vector.broadcast %cst_19 : f32 to vector<16x1xf32>
    %34 = arith.mulf %32, %33 : vector<16x1xf32>
    %35 = arith.subf %28, %34 : vector<16x1xf32>
    %cst_20 = arith.constant 1.600000e+01 : f32
    %36 = vector.broadcast %cst_20 : f32 to vector<16x1xf32>
    %37 = arith.cmpf oge, %35, %36 : vector<16x1xf32>
    %38 = arith.extui %37 : vector<16x1xi1> to vector<16x1xi32>
    %39 = arith.sitofp %38 : vector<16x1xi32> to vector<16x1xf32>
    %40 = arith.addf %32, %39 : vector<16x1xf32>
    %cst_21 = arith.constant 0.000000e+00 : f32
    %41 = vector.broadcast %cst_21 : f32 to vector<16x1xf32>
    %42 = arith.cmpf olt, %35, %41 : vector<16x1xf32>
    %43 = arith.extui %42 : vector<16x1xi1> to vector<16x1xi32>
    %44 = arith.sitofp %43 : vector<16x1xi32> to vector<16x1xf32>
    %45 = arith.subf %40, %44 : vector<16x1xf32>
    %cst_22 = arith.constant 1.600000e+01 : f32
    %46 = vector.broadcast %cst_22 : f32 to vector<16x1xf32>
    %47 = arith.mulf %45, %46 : vector<16x1xf32>
    %48 = arith.subf %28, %47 : vector<16x1xf32>
    %cst_23 = arith.constant 1.000000e+00 : f32
    %cst_24 = arith.constant 4.000000e+00 : f32
    %49 = arith.divf %cst_23, %cst_24 : f32
    %50 = vector.broadcast %49 : f32 to vector<16x1xf32>
    %51 = arith.mulf %48, %50 : vector<16x1xf32>
    %52 = math.floor %51 : vector<16x1xf32>
    %cst_25 = arith.constant 4.000000e+00 : f32
    %53 = vector.broadcast %cst_25 : f32 to vector<16x1xf32>
    %54 = arith.mulf %52, %53 : vector<16x1xf32>
    %55 = arith.subf %48, %54 : vector<16x1xf32>
    %cst_26 = arith.constant 4.000000e+00 : f32
    %56 = vector.broadcast %cst_26 : f32 to vector<16x1xf32>
    %57 = arith.cmpf oge, %55, %56 : vector<16x1xf32>
    %58 = arith.extui %57 : vector<16x1xi1> to vector<16x1xi32>
    %59 = arith.sitofp %58 : vector<16x1xi32> to vector<16x1xf32>
    %60 = arith.addf %52, %59 : vector<16x1xf32>
    %cst_27 = arith.constant 0.000000e+00 : f32
    %61 = vector.broadcast %cst_27 : f32 to vector<16x1xf32>
    %62 = arith.cmpf olt, %55, %61 : vector<16x1xf32>
    %63 = arith.extui %62 : vector<16x1xi1> to vector<16x1xi32>
    %64 = arith.sitofp %63 : vector<16x1xi32> to vector<16x1xf32>
    %65 = arith.subf %60, %64 : vector<16x1xf32>
    %cst_28 = arith.constant 4.000000e+00 : f32
    %66 = vector.broadcast %cst_28 : f32 to vector<16x1xf32>
    %67 = arith.mulf %65, %66 : vector<16x1xf32>
    %68 = arith.subf %48, %67 : vector<16x1xf32>
    %69 = vector.broadcast %15 : vector<1x32xf32> to vector<16x32xf32>
    %70 = vector.broadcast %68 : vector<16x1xf32> to vector<16x32xf32>
    %71 = arith.mulf %69, %70 : vector<16x32xf32>
    %72 = vector.broadcast %16 : vector<1x32xf32> to vector<16x32xf32>
    %73 = vector.broadcast %65 : vector<16x1xf32> to vector<16x32xf32>
    %74 = arith.mulf %72, %73 : vector<16x32xf32>
    %75 = arith.addf %71, %74 : vector<16x32xf32>
    %76 = vector.broadcast %14 : vector<1x32xf32> to vector<16x32xf32>
    %77 = arith.addf %75, %76 : vector<16x32xf32>
    %78 = vector.broadcast %12 : vector<1x32xf32> to vector<16x32xf32>
    %79 = arith.mulf %78, %23 : vector<16x32xf32>
    %80 = vector.broadcast %13 : vector<1x32xf32> to vector<16x32xf32>
    %81 = arith.addf %79, %80 : vector<16x32xf32>
    %82 = arith.mulf %81, %23 : vector<16x32xf32>
    %83 = arith.addf %82, %77 : vector<16x32xf32>
    %c0_29 = arith.constant 0 : index
    %c0_30 = arith.constant 0 : index
    %84 = vector.load %arg6[%c0_29, %c0_30] : memref<16x32xf32, #tpu.memory_space<vmem>>, vector<16x32xf32>
    tpu.vector_store %arg6[%c0_29, %c0_30], %83 {strides = array<i32>} : memref<16x32xf32, #tpu.memory_space<vmem>>, vector<16x32xf32>,
    return
  }
  func.func @transform_0(%arg0: i32) -> (i32, i32) {
    %c0_i32 = arith.constant 0 : i32
    %c0_i32_0 = arith.constant 0 : i32
    return %arg0, %c0_i32 : i32, i32
  }
  func.func @transform_1(%arg0: i32) -> (i32, i32) {
    %c0_i32 = arith.constant 0 : i32
    %c0_i32_0 = arith.constant 0 : i32
    %c0_i32_1 = arith.constant 0 : i32
    return %c0_i32, %c0_i32_0 : i32, i32
  }
  func.func @transform_2(%arg0: i32) -> (i32, i32) {
    %c0_i32 = arith.constant 0 : i32
    %c0_i32_0 = arith.constant 0 : i32
    %c0_i32_1 = arith.constant 0 : i32
    return %c0_i32, %c0_i32_0 : i32, i32
  }
  func.func @transform_3(%arg0: i32) -> (i32, i32) {
    %c0_i32 = arith.constant 0 : i32
    %c0_i32_0 = arith.constant 0 : i32
    %c0_i32_1 = arith.constant 0 : i32
    return %c0_i32, %c0_i32_0 : i32, i32
  }
  func.func @transform_4(%arg0: i32) -> (i32, i32) {
    %c0_i32 = arith.constant 0 : i32
    %c0_i32_0 = arith.constant 0 : i32
    %c0_i32_1 = arith.constant 0 : i32
    return %c0_i32, %c0_i32_0 : i32, i32
  }
  func.func @transform_5(%arg0: i32) -> (i32, i32) {
    %c0_i32 = arith.constant 0 : i32
    %c0_i32_0 = arith.constant 0 : i32
    return %arg0, %c0_i32 : i32, i32
  }
}

</mosaic_0001>

<llo_original>
// kernel: tpu_custom_call.1
$region0: #{tpu_custom_call.1}
  #allocation0 [shape = 'u32[]', space=smem, size = 0x4, offset = 0x4, fixed_abs, tag = 'smem constant byte address 0x4 - core index']
  #allocation1 [shape = 'u32[72,128]{1,0:T(1,128)}', space=vmem, size = 0x9000, scoped, tag = 'internal scratch']
  %s0 = inlined_call_operand.vmem [shape: bf16[32,192], index: 0, kind: input, shape index: {}]
  %s1 = inlined_call_operand.hbm [shape: bf16[192,128], index: 1, kind: input, shape index: {}]
  %s2 = inlined_call_operand.vmem [shape: f32[1,128], index: 2, kind: input, shape index: {}]
  %s3 = inlined_call_operand.vmem [shape: bf16[128,32], index: 3, kind: input, shape index: {}]
  %s4 = inlined_call_operand.vmem [shape: f32[8,32], index: 4, kind: input, shape index: {}]
  %s5 = inlined_call_operand.hbm [shape: f32[32,32], index: 5, kind: output, shape index: {}]
  %s6 = sld [smem:[#allocation0]]
  $region57: #{tpu_custom_call.1} parent=0
    _
  %s8 = ssub.s32 1, %s6
  %s9 = scalar_select 0, %s8, %s6
  $region1: #{tpu_custom_call.1} parent=0
    #allocation2 [shape = 'u8[49152]{0}', space=vmem, size = 0xc000, scoped, tag = 'input window, operand 1, single buffered']
    #allocation3 [shape = 's32[2]{0}', space=sflag, size = 0x8, scoped, tag = 'scoped memory for tpu_custom_call.1']
    #allocation4 [shape = 's32[2]{0}', space=sflag, size = 0x8, scoped, tag = 'scoped memory for tpu_custom_call.1']
    #allocation5 [shape = 'u8[16384]{0}', space=vmem, size = 0x4000, scoped, tag = 'output window, operand 0']
    %10 = vsyncpa [#allocation3], 0
    %11 = vsyncpa [#allocation4], 0
    %s12 = scalar_lea.sflag [#allocation4], 1
    %13 = vsyncpa %s12, 0
    loop: start=0, step=1, limit=4
    $region2: #{tpu_custom_call.1} parent=1 // loop_pre_header
      _
    $region3: #{tpu_custom_call.1} parent=1 // loop_header
      %s15 = sphi 0, %s19
      %p16 = scmp.ge.s32.totalorder %s15, 4
      %s25 = sphi 0, %s27
      %s28 = sphi 0, %s25
      %s29 = sphi 0, %s28
      %s45 = sphi 0, %s29
      %s49 = sphi 0, %s49
      %s51 = sphi 0, %s49
      %s52 = sphi 0, %s51
      %s66 = sphi 0, %s52
      %s70 = sphi 0, %s70
      %s72 = sphi 0, %s70
      %s73 = sphi 0, %s72
      %s87 = sphi 0, %s73
      %s91 = sphi 0, %s91
      %s93 = sphi 0, %s91
      %s94 = sphi 0, %s93
      %s108 = sphi 0, %s94
      %s112 = sphi 0, %s112
      %s114 = sphi 0, %s112
      %s115 = sphi 0, %s114
      %s129 = sphi 0, %s115
      %s135 = sphi 0, %s137
      %s138 = sphi 0, %s135
      %s139 = sphi 0, %s138
      %s155 = sphi 0, %s139
    $region4: #{tpu_custom_call.1} parent=1 // loop_header_branch
      %18 = sbr.rel (%p16) target = $region8
    $region5: #{tpu_custom_call.1} parent=1 // loop_body
      %s20 = ssub.s32 %s15, 1
      %s21 = ssub.s32 %s15, 2
      %s22 = sadd.s32 %s15, 1
      %s23 = ssub.s32 %s15, %s22
      %p24 = scmp.eq.s32.totalorder %s23, 0
      %s26 = sadd.s32 %s25, 1
      %s27 = scalar_select %p24, %s25, %s26
      %p30 = pneg %p24
      %p31 = scmp.eq.s32.totalorder %s15, 1
      %p32 = por %p30, %p31
      %p33 = scmp.ne.s32.totalorder %s25, %s28
      %p34 = scmp.eq.s32.totalorder %s15, 0
      %p35 = por %p33, %p34
      %p36 = scmp.ne.s32.totalorder %s25, %s28
      %p37 = scmp.eq.s32.totalorder %s20, 1
      %p38 = por %p36, %p37
      %p39 = scmp.ne.s32.totalorder %s28, %s29
      %p40 = scmp.eq.s32.totalorder %s20, 0
      %p41 = por %p39, %p40
      %p42 = scmp.ne.s32.totalorder %s28, %s29
      %p43 = scmp.eq.s32.totalorder %s21, 1
      %p44 = por %p42, %p43
      %p46 = scmp.ne.s32.totalorder %s29, %s45
      %p47 = scmp.eq.s32.totalorder %s21, 0
      %p48 = por %p46, %p47
      %s50 = sadd.s32 %s49, 1
      %p53 = scmp.eq.s32.totalorder %s15, 1
      %p54 = scmp.ne.s32.totalorder %s49, %s51
      %p55 = scmp.eq.s32.totalorder %s15, 0
      %p56 = por %p54, %p55
      %p57 = scmp.ne.s32.totalorder %s49, %s51
      %p58 = scmp.eq.s32.totalorder %s20, 1
      %p59 = por %p57, %p58
      %p60 = scmp.ne.s32.totalorder %s51, %s52
      %p61 = scmp.eq.s32.totalorder %s20, 0
      %p62 = por %p60, %p61
      %p63 = scmp.ne.s32.totalorder %s51, %s52
      %p64 = scmp.eq.s32.totalorder %s21, 1
      %p65 = por %p63, %p64
      %p67 = scmp.ne.s32.totalorder %s52, %s66
      %p68 = scmp.eq.s32.totalorder %s21, 0
      %p69 = por %p67, %p68
      %s71 = sadd.s32 %s70, 1
      %p74 = scmp.eq.s32.totalorder %s15, 1
      %p75 = scmp.ne.s32.totalorder %s70, %s72
      %p76 = scmp.eq.s32.totalorder %s15, 0
      %p77 = por %p75, %p76
      %p78 = scmp.ne.s32.totalorder %s70, %s72
      %p79 = scmp.eq.s32.totalorder %s20, 1
      %p80 = por %p78, %p79
      %p81 = scmp.ne.s32.totalorder %s72, %s73
      %p82 = scmp.eq.s32.totalorder %s20, 0
      %p83 = por %p81, %p82
      %p84 = scmp.ne.s32.totalorder %s72, %s73
      %p85 = scmp.eq.s32.totalorder %s21, 1
      %p86 = por %p84, %p85
      %p88 = scmp.ne.s32.totalorder %s73, %s87
      %p89 = scmp.eq.s32.totalorder %s21, 0
      %p90 = por %p88, %p89
      %s92 = sadd.s32 %s91, 1
      %p95 = scmp.eq.s32.totalorder %s15, 1
      %p96 = scmp.ne.s32.totalorder %s91, %s93
      %p97 = scmp.eq.s32.totalorder %s15, 0
      %p98 = por %p96, %p97
      %p99 = scmp.ne.s32.totalorder %s91, %s93
      %p100 = scmp.eq.s32.totalorder %s20, 1
      %p101 = por %p99, %p100
      %p102 = scmp.ne.s32.totalorder %s93, %s94
      %p103 = scmp.eq.s32.totalorder %s20, 0
      %p104 = por %p102, %p103
      %p105 = scmp.ne.s32.totalorder %s93, %s94
      %p106 = scmp.eq.s32.totalorder %s21, 1
      %p107 = por %p105, %p106
      %p109 = scmp.ne.s32.totalorder %s94, %s108
      %p110 = scmp.eq.s32.totalorder %s21, 0
      %p111 = por %p109, %p110
      %s113 = sadd.s32 %s112, 1
      %p116 = scmp.eq.s32.totalorder %s15, 1
      %p117 = scmp.ne.s32.totalorder %s112, %s114
      %p118 = scmp.eq.s32.totalorder %s15, 0
      %p119 = por %p117, %p118
      %p120 = scmp.ne.s32.totalorder %s112, %s114
      %p121 = scmp.eq.s32.totalorder %s20, 1
      %p122 = por %p120, %p121
      %p123 = scmp.ne.s32.totalorder %s114, %s115
      %p124 = scmp.eq.s32.totalorder %s20, 0
      %p125 = por %p123, %p124
      %p126 = scmp.ne.s32.totalorder %s114, %s115
      %p127 = scmp.eq.s32.totalorder %s21, 1
      %p128 = por %p126, %p127
      %p130 = scmp.ne.s32.totalorder %s115, %s129
      %p131 = scmp.eq.s32.totalorder %s21, 0
      %p132 = por %p130, %p131
      %s133 = ssub.s32 %s15, %s22
      %p134 = scmp.eq.s32.totalorder %s133, 0
      %s136 = sadd.s32 %s135, 1
      %s137 = scalar_select %p134, %s135, %s136
      %p140 = pneg %p134
      %p141 = scmp.eq.s32.totalorder %s15, 1
      %p142 = por %p140, %p141
      %p143 = scmp.ne.s32.totalorder %s135, %s138
      %p144 = scmp.eq.s32.totalorder %s15, 0
      %p145 = por %p143, %p144
      %p146 = scmp.ne.s32.totalorder %s135, %s138
      %p147 = scmp.eq.s32.totalorder %s20, 1
      %p148 = por %p146, %p147
      %p149 = scmp.ne.s32.totalorder %s138, %s139
      %p150 = scmp.eq.s32.totalorder %s20, 0
      %p151 = por %p149, %p150
      %p152 = scmp.ne.s32.totalorder %s138, %s139
      %p153 = scmp.eq.s32.totalorder %s21, 1
      %p154 = por %p152, %p153
      %p156 = scmp.ne.s32.totalorder %s139, %s155
      %p157 = scmp.eq.s32.totalorder %s21, 0
      %p158 = por %p156, %p157
      %p159 = scmp.le.s32.totalorder 1, %s15
      %p160 = scmp.lt.s32.totalorder %s15, 3
      %p161 = pnand %p159, %p160
      %p162 = pneg %p161
      // Predicated region
      $region9: #{tpu_custom_call.1} parent=5 // pred_check
        _
      $region10: #{tpu_custom_call.1} parent=5 // pred_check_branch
        %164 = sbr.rel (%p161) target = $region12
      $region11: #{tpu_custom_call.1} parent=5 // pred_region
        %s165 = ssub.s32 %s15, 1
        // Predicated region
        $region13: #{tpu_custom_call.1} parent=11 // pred_check
          %p166 = pneg %p62
        $region14: #{tpu_custom_call.1} parent=11 // pred_check_branch
          %168 = sbr.rel (%p166) target = $region16
        $region15: #{tpu_custom_call.1} parent=11 // pred_region
          %170 = vsyncadd [#allocation3], 0
          %s171 = sshll.u32 %s1, 4
          %s172 = int_to_ptr.hbm [resolvable:$true] %s171
          %s173 = sshll.u32 [#allocation2], 4
          %s174 = int_to_ptr.vmem [resolvable:$true] %s173
          %179 = dma.hbm_to_vmem [thread:$0]  %s172, 1536, %s174, [#allocation3], 64, 64, 4
        $region16: #{tpu_custom_call.1} parent=11 // pred_fallthru
          _
        // Predicated region
        $region17: #{tpu_custom_call.1} parent=11 // pred_check
          %p180 = pneg %p83
        $region18: #{tpu_custom_call.1} parent=11 // pred_check_branch
          %182 = sbr.rel (%p180) target = $region20
        $region19: #{tpu_custom_call.1} parent=11 // pred_region
          _
        $region20: #{tpu_custom_call.1} parent=11 // pred_fallthru
          _
        // Predicated region
        $region21: #{tpu_custom_call.1} parent=11 // pred_check
          %p183 = pneg %p104
        $region22: #{tpu_custom_call.1} parent=11 // pred_check_branch
          %185 = sbr.rel (%p183) target = $region24
        $region23: #{tpu_custom_call.1} parent=11 // pred_region
          _
        $region24: #{tpu_custom_call.1} parent=11 // pred_fallthru
          _
        // Predicated region
        $region25: #{tpu_custom_call.1} parent=11 // pred_check
          %p186 = pneg %p125
        $region26: #{tpu_custom_call.1} parent=11 // pred_check_branch
          %188 = sbr.rel (%p186) target = $region28
        $region27: #{tpu_custom_call.1} parent=11 // pred_region
          _
        $region28: #{tpu_custom_call.1} parent=11 // pred_fallthru
          _
      $region12: #{tpu_custom_call.1} parent=5 // pred_fallthru
        _
      %p189 = scmp.lt.s32.totalorder %s15, 2
      // Predicated region
      $region29: #{tpu_custom_call.1} parent=5 // pred_check
        %p190 = pneg %p189
      $region30: #{tpu_custom_call.1} parent=5 // pred_check_branch
        %192 = sbr.rel (%p190) target = $region32
      $region31: #{tpu_custom_call.1} parent=5 // pred_region
        // Predicated region
        $region33: #{tpu_custom_call.1} parent=31 // pred_check
          %p193 = pneg %p35
        $region34: #{tpu_custom_call.1} parent=31 // pred_check_branch
          %195 = sbr.rel (%p193) target = $region36
        $region35: #{tpu_custom_call.1} parent=31 // pred_region
          %s196 = smul.u32 2, %s15
          %p197 = scmp.lt.s32.totalorder %s196, 3
          %s198 = scalar_select %p197, %s196, 3
          %s199 = smul.addr %s198, 2
          %s200 = smul.addr %s199, 4
          %s201 = scalar_lea.vmem %s0, %s200
          %s202 = smul.u32 2, %s15
        $region36: #{tpu_custom_call.1} parent=31 // pred_fallthru
          _
      $region32: #{tpu_custom_call.1} parent=5 // pred_fallthru
        _
      %p203 = scmp.le.s32.totalorder 1, %s15
      %p204 = scmp.lt.s32.totalorder %s15, 3
      %p205 = pnand %p203, %p204
      %p206 = pneg %p205
      // Predicated region
      $region37: #{tpu_custom_call.1} parent=5 // pred_check
        _
      $region38: #{tpu_custom_call.1} parent=5 // pred_check_branch
        %208 = sbr.rel (%p205) target = $region40
      $region39: #{tpu_custom_call.1} parent=5 // pred_region
        %s209 = ssub.s32 %s15, 1
        // Predicated region
        $region41: #{tpu_custom_call.1} parent=39 // pred_check
          %p210 = pneg %p62
        $region42: #{tpu_custom_call.1} parent=39 // pred_check_branch
          %212 = sbr.rel (%p210) target = $region44
        $region43: #{tpu_custom_call.1} parent=39 // pred_region
          %214 = dma.done [#allocation3], 1536
        $region44: #{tpu_custom_call.1} parent=39 // pred_fallthru
          _
        %s215 = smul.u32 2, %s20
        %p216 = scmp.lt.s32.totalorder %s215, 3
        %s217 = scalar_select %p216, %s215, 3
        %s218 = smul.addr %s217, 2
        %s219 = smul.addr %s218, 4
        %s220 = scalar_lea.vmem %s0, %s219
        %p221 = pneg %p41
        %p222 = pneg %p38
        %p223 = pneg %p62
        %p224 = pneg %p59
        %p225 = pneg %p83
        %p226 = pneg %p80
        %p227 = pneg %p104
        %p228 = pneg %p101
        %p229 = pneg %p125
        %p230 = pneg %p122
        %p231 = pneg %p151
        %p232 = pneg %p148
        %s233 = sand.u32 %s138, 1
        %s234 = scalar_lea.sflag [#allocation4], %s233
        %s235 = sand.u32 %s138, 1
        %s236 = smul.addr %s235, 16
        %s237 = scalar_lea.vmem [#allocation5], %s236
        %s238 = smul.u32 2, %s20
        %p239 = scmp.lt.s32.totalorder %s238, 3
        %s240 = scalar_select %p239, %s238, 3
        %s241 = smul.addr %s240, 2
        %s242 = smul.addr %s241, 4
        %s243 = scalar_lea.vmem %s0, %s242
        %s244 = smul.u32 2, %s20
        %s245 = smul.u32 2, %s20
        %v247 = vld [vmem:[%s243] sm:$0xff]
        %v248 = vld [vmem:[%s243 + $0x8] sm:$0xff]
        %v249 = vld [vmem:[#allocation2] sm:$0xf]
        %v250 = vld [vmem:[#allocation2 + $0x4] sm:$0xf]
        %v251 = vld [vmem:[#allocation2 + $0x8] sm:$0xf]
        %v252 = vld [vmem:[#allocation2 + $0xc] sm:$0xf]
        %v253 = vld [vmem:[#allocation2 + $0x10] sm:$0xf]
        %v254 = vld [vmem:[#allocation2 + $0x14] sm:$0xf]
        %v255 = vld [vmem:[#allocation2 + $0x18] sm:$0xf]
        %v256 = vld [vmem:[#allocation2 + $0x1c] sm:$0xf]
        %v257 = vld [vmem:[#allocation2 + $0x20] sm:$0xf]
        %v258 = vld [vmem:[#allocation2 + $0x24] sm:$0xf]
        %v259 = vld [vmem:[#allocation2 + $0x28] sm:$0xf]
        %v260 = vld [vmem:[#allocation2 + $0x2c] sm:$0xf]
        %v261 = vld [vmem:[#allocation2 + $0x30] sm:$0xf]
        %v262 = vld [vmem:[#allocation2 + $0x34] sm:$0xf]
        %v263 = vld [vmem:[#allocation2 + $0x38] sm:$0xf]
        %v264 = vld [vmem:[#allocation2 + $0x3c] sm:$0xf]
        %v265 = vld [vmem:[#allocation2 + $0x40] sm:$0xf]
        %v266 = vld [vmem:[#allocation2 + $0x44] sm:$0xf]
        %v267 = vld [vmem:[#allocation2 + $0x48] sm:$0xf]
        %v268 = vld [vmem:[#allocation2 + $0x4c] sm:$0xf]
        %v269 = vld [vmem:[#allocation2 + $0x50] sm:$0xf]
        %v270 = vld [vmem:[#allocation2 + $0x54] sm:$0xf]
        %v271 = vld [vmem:[#allocation2 + $0x58] sm:$0xf]
        %v272 = vld [vmem:[#allocation2 + $0x5c] sm:$0xf]
        %v273 = vld [vmem:[%s2] sm:$0x1]
        %v275 = vperm.slane %v273, 0
        %v279 = vunpack.c.l.b16 %v247
        %v280 = vunpack.c.h.b16 %v247
        %v281 = vunpack.c.l.b16 %v248
        %v282 = vunpack.c.h.b16 %v248
        %v283 = vpack.c.b16 %v281, %v279
        %v284 = vpack.c.b16 %v282, %v280
        %v310 = vunpack.c.l.b16 %v249
        %v311 = vunpack.c.l.b16 %v250
        %v312 = vunpack.c.l.b16 %v251
        %v313 = vunpack.c.l.b16 %v252
        %v314 = vunpack.c.l.b16 %v253
        %v315 = vunpack.c.l.b16 %v254
        %v316 = vunpack.c.l.b16 %v255
        %v317 = vunpack.c.l.b16 %v256
        %v318 = vunpack.c.l.b16 %v257
        %v319 = vunpack.c.l.b16 %v258
        %v320 = vunpack.c.l.b16 %v259
        %v321 = vunpack.c.l.b16 %v260
        %v322 = vunpack.c.l.b16 %v261
        %v323 = vunpack.c.l.b16 %v262
        %v324 = vunpack.c.l.b16 %v263
        %v325 = vunpack.c.l.b16 %v264
        %v326 = vunpack.c.l.b16 %v265
        %v327 = vunpack.c.l.b16 %v266
        %v328 = vunpack.c.l.b16 %v267
        %v329 = vunpack.c.l.b16 %v268
        %v330 = vunpack.c.l.b16 %v269
        %v331 = vunpack.c.l.b16 %v270
        %v332 = vunpack.c.l.b16 %v271
        %v333 = vunpack.c.l.b16 %v272
        %v334 = vpack.c.b16 %v311, %v310
        %v335 = vpack.c.b16 %v313, %v312
        %v336 = vpack.c.b16 %v315, %v314
        %v337 = vpack.c.b16 %v317, %v316
        %v338 = vpack.c.b16 %v319, %v318
        %v339 = vpack.c.b16 %v321, %v320
        %v340 = vpack.c.b16 %v323, %v322
        %v341 = vpack.c.b16 %v325, %v324
        %v342 = vpack.c.b16 %v327, %v326
        %v343 = vpack.c.b16 %v329, %v328
        %v344 = vpack.c.b16 %v331, %v330
        %v345 = vpack.c.b16 %v333, %v332
        %vm358 = vcmask 523264
        %v360 = vsel %vm358, %v284, 0
        %362 = vmatpush.bf16.msra.mxu0 %v341
        %363 = vmatpush.bf16.msra.mxu0 %v340
        %364 = vmatpush.bf16.msra.mxu0 %v339
        %365 = vmatpush.bf16.msra.mxu0 %v338
        %366 = vmatpush.bf16.msra.mxu0 %v337
        %367 = vmatpush.bf16.msra.mxu0 %v336
        %368 = vmatpush.bf16.msra.mxu0 %v335
        %369 = vmatpush.bf16.msra.mxu0 %v334
        %370 = vmatmul.bf16.gmra.mxu0 %v283
        %v371 = vpop.f32.mrf.mxu0
        %v372 = vadd.f32 %v275, %v371
        %v373 = vpop.f32.mrf.mxu0
        %v374 = vadd.f32 %v275, %v373
        %375 = vdwg.mxu0
        %376 = vmatpush.bf16.msra.mxu0 0
        %377 = vmatpush.bf16.msra.mxu0 0
        %378 = vmatpush.bf16.msra.mxu0 0
        %379 = vmatpush.bf16.msra.mxu0 0
        %380 = vmatpush.bf16.msra.mxu0 %v345
        %381 = vmatpush.bf16.msra.mxu0 %v344
        %382 = vmatpush.bf16.msra.mxu0 %v343
        %383 = vmatpush.bf16.msra.mxu0 %v342
        %384 = vmatmul.bf16.gmra.mxu0 %v360
        %v385 = vpop.f32.mrf.mxu0
        %v386 = vadd.f32 %v372, %v385
        %v387 = vpop.f32.mrf.mxu0
        %v388 = vadd.f32 %v374, %v387
        %389 = vdwg.mxu0
        %v390 = vmax.f32 %v386, 0.0
        %v391 = vmax.f32 %v388, 0.0
        %v392 = vpack.c.bf16 %v391, %v390
        %v393 = vld [vmem:[%s3] sm:$0xf]
        %v394 = vld [vmem:[%s3 + $0x4] sm:$0xf]
        %v395 = vld [vmem:[%s3 + $0x8] sm:$0xf]
        %v396 = vld [vmem:[%s3 + $0xc] sm:$0xf]
        %v397 = vld [vmem:[%s3 + $0x10] sm:$0xf]
        %v398 = vld [vmem:[%s3 + $0x14] sm:$0xf]
        %v399 = vld [vmem:[%s3 + $0x18] sm:$0xf]
        %v400 = vld [vmem:[%s3 + $0x1c] sm:$0xf]
        %v401 = vld [vmem:[%s3 + $0x20] sm:$0xf]
        %v402 = vld [vmem:[%s3 + $0x24] sm:$0xf]
        %v403 = vld [vmem:[%s3 + $0x28] sm:$0xf]
        %v404 = vld [vmem:[%s3 + $0x2c] sm:$0xf]
        %v405 = vld [vmem:[%s3 + $0x30] sm:$0xf]
        %v406 = vld [vmem:[%s3 + $0x34] sm:$0xf]
        %v407 = vld [vmem:[%s3 + $0x38] sm:$0xf]
        %v408 = vld [vmem:[%s3 + $0x3c] sm:$0xf]
        %v409 = vld [vmem:[%s4] sm:$0x1]
        %v410 = vld [vmem:[%s4 + $0x1] sm:$0x1]
        %v411 = vld [vmem:[%s4 + $0x2] sm:$0x1]
        %v412 = vld [vmem:[%s4 + $0x3] sm:$0x1]
        %v413 = vld [vmem:[%s4 + $0x4] sm:$0x1]
        %v414 = vld [vmem:[%s4 + $0x5] sm:$0x1]
        %v415 = vperm.slane %v409, 0
        %v432 = vunpack.c.l.b16 %v393
        %v433 = vunpack.c.l.b16 %v394
        %v434 = vunpack.c.l.b16 %v395
        %v435 = vunpack.c.l.b16 %v396
        %v436 = vunpack.c.l.b16 %v397
        %v437 = vunpack.c.l.b16 %v398
        %v438 = vunpack.c.l.b16 %v399
        %v439 = vunpack.c.l.b16 %v400
        %v440 = vunpack.c.l.b16 %v401
        %v441 = vunpack.c.l.b16 %v402
        %v442 = vunpack.c.l.b16 %v403
        %v443 = vunpack.c.l.b16 %v404
        %v444 = vunpack.c.l.b16 %v405
        %v445 = vunpack.c.l.b16 %v406
        %v446 = vunpack.c.l.b16 %v407
        %v447 = vunpack.c.l.b16 %v408
        %v448 = vpack.c.b16 %v433, %v432
        %v449 = vpack.c.b16 %v435, %v434
        %v450 = vpack.c.b16 %v437, %v436
        %v451 = vpack.c.b16 %v439, %v438
        %v452 = vpack.c.b16 %v441, %v440
        %v453 = vpack.c.b16 %v443, %v442
        %v454 = vpack.c.b16 %v445, %v444
        %v455 = vpack.c.b16 %v447, %v446
        %464 = vmatpush.bf16.msra.mxu0 %v455
        %465 = vmatpush.bf16.msra.mxu0 %v454
        %466 = vmatpush.bf16.msra.mxu0 %v453
        %467 = vmatpush.bf16.msra.mxu0 %v452
        %468 = vmatpush.bf16.msra.mxu0 %v451
        %469 = vmatpush.bf16.msra.mxu0 %v450
        %470 = vmatpush.bf16.msra.mxu0 %v449
        %471 = vmatpush.bf16.msra.mxu0 %v448
        %472 = vmatmul.bf16.gmra.mxu0 %v392
        %v473 = vpop.f32.mrf.mxu0
        %v474 = vadd.f32 %v415, %v473
        %v475 = vpop.f32.mrf.mxu0
        %v476 = vadd.f32 %v415, %v475
        %477 = vdwg.mxu0
        %v478 = vxor.u32 %v474, 2147483648
        %v479 = vxor.u32 %v476, 2147483648
        %v480 = vmul.f32 %v478, 1.442695
        %v481 = vpow.pop %v480
        %v482 = vmul.f32 %v479, 1.442695
        %v483 = vpow.pop %v482
        %v484 = vadd.f32 %v481, 1.0
        %v485 = vadd.f32 %v483, 1.0
        %v486 = vrcp.pop %v484
        %v487 = vmul.f32 %v484, %v486
        %v488 = vsub.f32 1.0, %v487
        %v489 = vmul.f32 %v486, %v488
        %v490 = vadd.f32 %v486, %v489
        %vm491 = vweird.f32 %v484
        %vm492 = vweird.f32 %v486
        %vm493 = vmor %vm491, %vm492
        %v494 = vsel %vm493, %v486, %v490
        %v495 = vand.u32 2147483647, %v484
        %vm496 = vcmp.eq.f32.partialorder %v495, 8.507059e+37
        %v497 = vand.u32 %v484, 2147483648
        %v498 = vor.u32 1.1754944e-38, %v497
        %v499 = vsel %vm496, %v498, %v494
        %v500 = vmul.f32 1.0, %v499
        %v501 = vrcp.pop %v485
        %v502 = vmul.f32 %v485, %v501
        %v503 = vsub.f32 1.0, %v502
        %v504 = vmul.f32 %v501, %v503
        %v505 = vadd.f32 %v501, %v504
        %vm506 = vweird.f32 %v485
        %vm507 = vweird.f32 %v501
        %vm508 = vmor %vm506, %vm507
        %v509 = vsel %vm508, %v501, %v505
        %v510 = vand.u32 2147483647, %v485
        %vm511 = vcmp.eq.f32.partialorder %v510, 8.507059e+37
        %v512 = vand.u32 %v485, 2147483648
        %v513 = vor.u32 1.1754944e-38, %v512
        %v514 = vsel %vm511, %v513, %v509
        %v515 = vmul.f32 1.0, %v514
        %s516 = smul.u32 %s20, 16
        %v517 = vlaneseq
        %v518 = vshrl.u32 %v517, 7
        %v519 = vadd.s32 %v518, 8
        %v520 = vstv %s516
        %v521 = vadd.s32 %v520, %v518
        %v522 = vadd.s32 %v520, %v519
        %v523 = vcvt.s32.f32 %v521
        %v524 = vcvt.s32.f32 %v522
        %v525 = vmul.f32 %v523, 0.0625
        %v526 = vmul.f32 %v524, 0.0625
        %v527 = vfloor.f32 %v525
        %v528 = vfloor.f32 %v526
        %v529 = vmul.f32 %v527, 16.0
        %v530 = vmul.f32 %v528, 16.0
        %v531 = vsub.f32 %v523, %v529
        %v532 = vsub.f32 %v524, %v530
        %vm533 = vcmp.ge.f32.partialorder %v531, 16.0
        %vm534 = vcmp.ge.f32.partialorder %v532, 16.0
        %v535 = vsel %vm533, 1, 0
        %v536 = vsel %vm534, 1, 0
        %v537 = vcvt.s32.f32 %v535
        %v538 = vcvt.s32.f32 %v536
        %v539 = vadd.f32 %v527, %v537
        %v540 = vadd.f32 %v528, %v538
        %vm541 = vcmp.lt.f32.partialorder %v531, 0.0
        %vm542 = vcmp.lt.f32.partialorder %v532, 0.0
        %v543 = vsel %vm541, 1, 0
        %v544 = vsel %vm542, 1, 0
        %v545 = vcvt.s32.f32 %v543
        %v546 = vcvt.s32.f32 %v544
        %v547 = vsub.f32 %v539, %v545
        %v548 = vsub.f32 %v540, %v546
        %v549 = vmul.f32 %v547, 16.0
        %v550 = vmul.f32 %v548, 16.0
        %v551 = vsub.f32 %v523, %v549
        %v552 = vsub.f32 %v524, %v550
        %v553 = vmul.f32 %v551, 0.25
        %v554 = vmul.f32 %v552, 0.25
        %v555 = vfloor.f32 %v553
        %v556 = vfloor.f32 %v554
        %v557 = vmul.f32 %v555, 4.0
        %v558 = vmul.f32 %v556, 4.0
        %v559 = vsub.f32 %v551, %v557
        %v560 = vsub.f32 %v552, %v558
        %vm561 = vcmp.ge.f32.partialorder %v559, 4.0
        %vm562 = vcmp.ge.f32.partialorder %v560, 4.0
        %v563 = vsel %vm561, 1, 0
        %v564 = vsel %vm562, 1, 0
        %v565 = vcvt.s32.f32 %v563
        %v566 = vcvt.s32.f32 %v564
        %v567 = vadd.f32 %v555, %v565
        %v568 = vadd.f32 %v556, %v566
        %vm569 = vcmp.lt.f32.partialorder %v559, 0.0
        %vm570 = vcmp.lt.f32.partialorder %v560, 0.0
        %v571 = vsel %vm569, 1, 0
        %v572 = vsel %vm570, 1, 0
        %v573 = vcvt.s32.f32 %v571
        %v574 = vcvt.s32.f32 %v572
        %v575 = vsub.f32 %v567, %v573
        %v576 = vsub.f32 %v568, %v574
        %v577 = vmul.f32 %v575, 4.0
        %v578 = vmul.f32 %v576, 4.0
        %v579 = vsub.f32 %v551, %v577
        %v580 = vsub.f32 %v552, %v578
        %v581 = vperm.slane %v413, 0
        %v582 = vmul.f32 %v581, %v579
        %v583 = vmul.f32 %v581, %v580
        %v584 = vperm.slane %v414, 0
        %v585 = vmul.f32 %v584, %v575
        %v586 = vmul.f32 %v584, %v576
        %v587 = vadd.f32 %v582, %v585
        %v588 = vadd.f32 %v583, %v586
        %v589 = vperm.slane %v412, 0
        %v590 = vadd.f32 %v587, %v589
        %v591 = vadd.f32 %v588, %v589
        %v592 = vperm.slane %v410, 0
        %v593 = vmul.f32 %v592, %v500
        %v594 = vmul.f32 %v592, %v515
        %v595 = vperm.slane %v411, 0
        %v596 = vadd.f32 %v593, %v595
        %v597 = vadd.f32 %v594, %v595
        %v598 = vmul.f32 %v596, %v500
        %v599 = vmul.f32 %v597, %v515
        %v600 = vadd.f32 %v598, %v590
        %v601 = vadd.f32 %v599, %v591
        %vm602 = vcmask 261120
        %603 = vst.msk [vmem:[%s237] sm:$0xff] %vm602, %v600
        %604 = vst.msk [vmem:[%s237 + $0x8] sm:$0xff] %vm602, %v601
        %s605 = sand.u32 %s138, 1
        %s606 = scalar_lea.sflag [#allocation4], %s605
        %s607 = sand.u32 %s138, 1
        %s608 = smul.addr %s607, 16
        %s609 = scalar_lea.vmem [#allocation5], %s608
        // Predicated region
        $region45: #{tpu_custom_call.1} parent=39 // pred_check
          %p610 = pneg %p148
        $region46: #{tpu_custom_call.1} parent=39 // pred_check_branch
          %612 = sbr.rel (%p610) target = $region48
        $region47: #{tpu_custom_call.1} parent=39 // pred_region
          %s613 = smul.u32 2, %s20
          %615 = vsyncadd %s606, 0
          %s616 = smul.addr %s613, 8
          %s617 = scalar_lea.hbm %s5, %s616
          %s618 = sshll.u32 %s609, 4
          %s619 = int_to_ptr.vmem [resolvable:$true] %s618
          %s620 = sshll.u32 %s617, 4
          %s621 = int_to_ptr.hbm [resolvable:$true] %s620
          %626 = dma.vmem_to_hbm [thread:$0]  %s619, 256, %s621, %s606, 128, 128, 8
        $region48: #{tpu_custom_call.1} parent=39 // pred_fallthru
          _
      $region40: #{tpu_custom_call.1} parent=5 // pred_fallthru
        _
      %p627 = scmp.le.s32.totalorder 2, %s15
      // Predicated region
      $region49: #{tpu_custom_call.1} parent=5 // pred_check
        %p628 = pneg %p627
      $region50: #{tpu_custom_call.1} parent=5 // pred_check_branch
        %630 = sbr.rel (%p628) target = $region52
      $region51: #{tpu_custom_call.1} parent=5 // pred_region
        %s631 = ssub.s32 %s15, 2
        // Predicated region
        $region53: #{tpu_custom_call.1} parent=51 // pred_check
          %p632 = pneg %p154
        $region54: #{tpu_custom_call.1} parent=51 // pred_check_branch
          %634 = sbr.rel (%p632) target = $region56
        $region55: #{tpu_custom_call.1} parent=51 // pred_region
          %s635 = sand.u32 %s139, 1
          %s636 = scalar_lea.sflag [#allocation4], %s635
          %s637 = sand.u32 %s139, 1
          %s638 = smul.addr %s637, 16
          %s639 = scalar_lea.vmem [#allocation5], %s638
          %641 = dma.done %s636, 256
        $region56: #{tpu_custom_call.1} parent=51 // pred_fallthru
          _
      $region52: #{tpu_custom_call.1} parent=5 // pred_fallthru
        _
    $region6: #{tpu_custom_call.1} parent=1 // loop_footer
      %s19 = sadd.s32 1, %s15
    $region7: #{tpu_custom_call.1} parent=1 // loop_footer_branch
      %14 = sbr.rel target = $region3
    $region8: #{tpu_custom_call.1} parent=1 // loop_exit
      _
    %642 = vsyncpa [#allocation3], 1
    %s643 = scalar_lea.sflag [#allocation3], 1
    %644 = vsyncpa %s643, 1
    %645 = vsyncpa [#allocation4], 1
    %s646 = scalar_lea.sflag [#allocation4], 1
    %647 = vsyncpa %s646, 1

</llo_original>
